<compile_context>
chip_gen: v7x
topology: tpu7x:2x2x1
jax: 0.10.0
libtpu: 0.0.40
codegen_flags: <defaults>
</compile_context>

<pallas_src>
import jax
import jax.numpy as jnp
from jax.experimental import pallas as pl
from jax.experimental.pallas import tpu as pltpu


# ----------------------------------------------------------------------------
# Fused kernel: proj+backbone matmul, GELU, per-batch mean-pool accumulate, fc
# ----------------------------------------------------------------------------
def _make_kernel(n_tok, tile_m, n_pad, approximate):
    inv_n_tok = 1.0 / float(n_tok)
    grouped = (tile_m % 8 == 0)

    def kernel(feat_ref,    # (1, tile_m, feat_dim)  bf16 token tile of batch b
               w_pb_ref,    # (feat_dim, num_features) bf16, fused proj@backbone
               b_pb_ref,    # (1, num_features) f32, fused bias
               w_fc_ref,    # (num_features, 1) f32
               b_fc_ref,    # (1, 1) f32
               out_ref,     # (1, 1, 1) f32
               acc_ref):    # (8, num_features) f32 scratch (per-batch pool sum)
        t = pl.program_id(1)

        @pl.when(t == 0)
        def _init():
            acc_ref[...] = jnp.zeros_like(acc_ref)

        # Fused HybridEmbed.proj (1x1 conv) + surrogate backbone linear:
        # single bf16 MXU matmul with f32 accumulation per token tile.
        h = jnp.dot(feat_ref[0], w_pb_ref[...],
                    preferred_element_type=jnp.float32) + b_pb_ref[...]
        # tanh-approx GELU -> transcendental goes to the EUP slot (VALU relief).
        h = jax.nn.gelu(h, approximate=approximate)

        # Global-average-pool numerator: keep 8 sublane-aligned partial rows so
        # the per-tile update is pure VPU adds; collapse once per batch below.
        if grouped:
            acc_ref[...] += h.reshape(-1, 8, h.shape[-1]).sum(axis=0)
        else:
            acc_ref[0:1, :] += jnp.sum(h, axis=0, keepdims=True)

        @pl.when(t == pl.num_programs(1) - 1)
        def _finalize():
            total = jnp.sum(acc_ref[...], axis=0, keepdims=True)       # (1, F)
            if n_pad:
                # Padded tokens are all-zero rows -> each contributed exactly
                # gelu(b_pb); subtract that constant once (no per-tile mask).
                total = total - float(n_pad) * jax.nn.gelu(
                    b_pb_ref[...], approximate=approximate)
            pooled = total * inv_n_tok                                  # (1, F)
            res = jnp.dot(pooled, w_fc_ref[...],
                          preferred_element_type=jnp.float32) + b_fc_ref[...]
            out_ref[0] = res                                            # (1, 1)

    return kernel


def _choose_tile(n_tok, tm_cap):
    """Largest divisor of n_tok that is a multiple of 8 (or n_tok itself) <= cap."""
    best = 0
    d = 1
    while d * d <= n_tok:
        if n_tok % d == 0:
            for c in (d, n_tok // d):
                if c <= tm_cap and (c % 8 == 0 or c == n_tok):
                    best = max(best, c)
        d += 1
    return best


# ----------------------------------------------------------------------------
# Wrapper (surrogate CNN stem in XLA, parameter fusion, pallas_call, squeeze)
# ----------------------------------------------------------------------------
def pet2_hybrid_forward(x_nchw, params, *, tm=7168, approximate_gelu=True,
                        vmem_limit_bytes=32 * 1024 * 1024):
    """Forward pass; x_nchw is PyTorch-layout (B, C, H, W)."""
    B = x_nchw.shape[0]

    # --- surrogate CNN feature extractor (HybridEmbed.backbone) --------------
    # TODO(synk): stands in for the pretrained EfficientNetV2-M feature
    # extractor; run as a plain XLA conv (NHWC out) so no im2col tensor is ever
    # materialized in HBM.
    feat = jax.lax.conv_general_dilated(
        x_nchw.astype(jnp.float32), params["w_stem"],
        window_strides=(2, 2), padding=((1, 1), (1, 1)),
        dimension_numbers=("NCHW", "OIHW", "NHWC"))
    # bias + ReLU + bf16 cast in one expression -> fuses into the conv epilogue
    # (single bf16 HBM write of the token tensor, no extra f32 pass).
    feat = jnp.maximum(feat + params["b_stem"], 0.0).astype(jnp.bfloat16)
    H2, W2, feat_dim = feat.shape[1], feat.shape[2], feat.shape[3]
    n_tok = H2 * W2

    # Token layout == proj(...).flatten(2).transpose(1, 2): channel-last rows.
    feat = feat.reshape(B, n_tok, feat_dim)

    # --- algebraic fusion of HybridEmbed.proj and the backbone stage ---------
    w_pb = jnp.dot(params["w_proj"], params["w_bb"]).astype(jnp.bfloat16)
    b_pb = (jnp.dot(params["b_proj"], params["w_bb"])
            + params["b_bb"]).astype(jnp.float32)
    num_features = w_pb.shape[-1]

    # --- VMEM-derived tile cap (valid for v7x 64 MiB as well as v5e/v6e) -----
    # per-row cost: 2x double-buffered bf16 input rows + f32 intermediates.
    budget = int(vmem_limit_bytes * 0.75)
    fixed = feat_dim * num_features * 2 + 8 * num_features * 4 + (1 << 20)
    per_row = 2 * feat_dim * 2 + 8 * num_features
    cap = max(8, (max(budget - fixed, 8 * per_row) // per_row) // 8 * 8)
    tm_cap = max(1, min(tm, cap, n_tok))

    tile_m = _choose_tile(n_tok, tm_cap)
    if tile_m:
        n_tok_pad, n_pad = n_tok, 0               # divisor path: no pad, no mask
    else:
        # No multiple-of-8 divisor fits: zero-pad the token axis; the constant
        # contribution of the padded rows is removed in the finalize branch.
        tile_m = max(8, (tm_cap // 8) * 8)
        n_tok_pad = -(-n_tok // tile_m) * tile_m
        n_pad = n_tok_pad - n_tok
        feat = jnp.pad(feat, ((0, 0), (0, n_pad), (0, 0)))
    n_tiles = n_tok_pad // tile_m

    kernel = _make_kernel(n_tok, tile_m, n_pad, approximate_gelu)

    out = pl.pallas_call(
        kernel,
        out_shape=jax.ShapeDtypeStruct((B, 1, 1), jnp.float32),
        grid_spec=pltpu.PrefetchScalarGridSpec(
            num_scalar_prefetch=0,
            grid=(B, n_tiles),                     # reduction (token) axis last
            in_specs=[
                # streamed token tiles (auto double-buffered; on v5e a deeper
                # pipeline_mode=pl.Buffered(3) is an optional small win)
                pl.BlockSpec((1, tile_m, feat_dim), lambda b, t: (b, t, 0)),
                # VMEM-resident weights / biases (constant index maps)
                pl.BlockSpec((feat_dim, num_features), lambda b, t: (0, 0)),
                pl.BlockSpec((1, num_features), lambda b, t: (0, 0)),
                pl.BlockSpec((num_features, 1), lambda b, t: (0, 0)),
                pl.BlockSpec((1, 1), lambda b, t: (0, 0)),
            ],
            out_specs=pl.BlockSpec((1, 1, 1), lambda b, t: (b, 0, 0)),
            scratch_shapes=[pltpu.VMEM((8, num_features), jnp.float32)],
        ),
        compiler_params=pltpu.CompilerParams(
            dimension_semantics=("parallel", "arbitrary"),   # batch across TCs
            vmem_limit_bytes=vmem_limit_bytes,               # fits v7x 64 MiB
        ),
    )(feat, w_pb, b_pb, params["w_fc"], params["b_fc"])

    # output.squeeze(-1)
    return out[:, 0, 0]


# ----------------------------------------------------------------------------
# Pure-JAX reference (exact-erf GELU = torch.nn.GELU default) for correctness
# ----------------------------------------------------------------------------
def reference_forward(x_nchw, params):
    B = x_nchw.shape[0]
    feat = jax.lax.conv_general_dilated(
        x_nchw.astype(jnp.float32), params["w_stem"],
        window_strides=(2, 2), padding=((1, 1), (1, 1)),
        dimension_numbers=("NCHW", "OIHW", "NHWC"))
    feat = jnp.maximum(feat + params["b_stem"], 0.0)
    H2, W2, fd = feat.shape[1], feat.shape[2], feat.shape[3]
    tok = feat.reshape(B, H2 * W2, fd).astype(jnp.bfloat16)
    w_pb = jnp.dot(params["w_proj"], params["w_bb"]).astype(jnp.bfloat16)
    b_pb = jnp.dot(params["b_proj"], params["w_bb"]) + params["b_bb"]
    h = jax.nn.gelu(
        jnp.dot(tok, w_pb, preferred_element_type=jnp.float32) + b_pb,
        approximate=False)                        # exact erf, torch default
    pooled = jnp.mean(h, axis=1)
    return (jnp.dot(pooled, params["w_fc"]) + params["b_fc"]).reshape(B)


# ----------------------------------------------------------------------------
# Deterministic parameter construction (synthetic, in-script)
# ----------------------------------------------------------------------------
def make_params(in_chans=3, feat_dim=128, embed_dim=192, num_features=128):
    # feat_dim / num_features kept at 128 so every streamed vreg is lane-dense.
    # (real Swin-L widths would be 192 / 1536 -- TODO(synk): surrogate dims;
    #  pad K/N toward 256 for the v6e/v7x MXU at real widths.)
    key = jax.random.PRNGKey(0)
    ks = jax.random.split(key, 8)

    def init(k, shape, fan_in):
        return jax.random.normal(k, shape, jnp.float32) / jnp.sqrt(float(fan_in))

    return {
        "w_stem": init(ks[0], (feat_dim, in_chans, 3, 3), in_chans * 9),
        "b_stem": jnp.zeros((feat_dim,), jnp.float32),
        "w_proj": init(ks[1], (feat_dim, embed_dim), feat_dim),
        "b_proj": init(ks[2], (1, embed_dim), feat_dim),
        "w_bb":   init(ks[3], (embed_dim, num_features), embed_dim),
        "b_bb":   init(ks[4], (1, num_features), embed_dim),
        "w_fc":   init(ks[5], (num_features, 1), num_features),
        "b_fc":   jnp.zeros((1, 1), jnp.float32),
    }


if __name__ == "__main__":
    params = make_params(in_chans=3)
    k1, k2 = jax.random.split(jax.random.PRNGKey(0))

    # Config 1: divisor-tile path.  H=W=16 -> 8x8 feature map -> n_tok=64;
    # tm=16 selects tile_m=16 (exact divisor, 4 tiles/batch, no pad, no mask)
    # and exercises the multi-tile accumulator.  At real 448x448 inputs the
    # default tm=7168 gives 7 tiles/batch.
    x1 = jax.random.normal(k1, (2, 3, 16, 16), jnp.float32)
    out1 = jax.jit(lambda img: pet2_hybrid_forward(img, params, tm=16))(x1)
    jax.block_until_ready(out1)
    assert out1.shape == (2,), out1.shape
    ref1 = reference_forward(x1, params)
    assert jnp.allclose(out1, ref1, rtol=2e-2, atol=2e-2), (out1, ref1)

    # Config 2: fallback path.  H=W=12 -> 6x6 -> n_tok=36 has no multiple-of-8
    # divisor <= tm, so the token axis is zero-padded and the finalize branch
    # subtracts n_pad * gelu(b_pb) (still no per-tile mask).
    x2 = jax.random.normal(k2, (2, 3, 12, 12), jnp.float32)
    out2 = jax.jit(lambda img: pet2_hybrid_forward(img, params, tm=16))(x2)
    jax.block_until_ready(out2)
    ref2 = reference_forward(x2, params)
    assert jnp.allclose(out2, ref2, rtol=2e-2, atol=2e-2), (out2, ref2)

    print("KERNEL_OK")
</pallas_src>

<mosaic_0001>
module attributes {stable_mosaic.version = 11 : i64} {
  func.func @kernel(%arg0: i32, %arg1: i32, %arg2: memref<1x16x128xbf16, #tpu.memory_space<vmem>>, %arg3: memref<128x128xbf16, #tpu.memory_space<vmem>>, %arg4: memref<1x128xf32, #tpu.memory_space<vmem>>, %arg5: memref<128x1xf32, #tpu.memory_space<vmem>>, %arg6: memref<1x1xf32, #tpu.memory_space<vmem>>, %arg7: memref<1x1x1xf32, #tpu.memory_space<vmem>>, %arg8: memref<8x128xf32, #tpu.memory_space<vmem>>) attributes {dimension_semantics = [#tpu.dimension_semantics<parallel>, #tpu.dimension_semantics<arbitrary>], iteration_bounds = array<i64: 2, 4>, scalar_prefetch = 0 : i64, scratch_operands = 1 : i64, tpu.core_type = #tpu.core_type<tc>, window_params = [{transform_indices = @transform_0, window_bounds = array<i64: 1, 16, 128>}, {pipeline_mode = #tpu.pipeline_mode<synchronous>, transform_indices = @transform_1, window_bounds = array<i64: 128, 128>}, {pipeline_mode = #tpu.pipeline_mode<synchronous>, transform_indices = @transform_2, window_bounds = array<i64: 1, 128>}, {pipeline_mode = #tpu.pipeline_mode<synchronous>, transform_indices = @transform_3, window_bounds = array<i64: 128, 1>}, {pipeline_mode = #tpu.pipeline_mode<synchronous>, transform_indices = @transform_4, window_bounds = array<i64: 1, 1>}, {transform_indices = @transform_5, window_bounds = array<i64: 1, 1, 1>}]} {
    %c0_i32 = arith.constant 0 : i32
    %0 = arith.cmpi eq, %arg1, %c0_i32 : i32
    %1 = arith.extui %0 : i1 to i32
    %c0_i32_0 = arith.constant 0 : i32
    %2 = arith.cmpi ne, %1, %c0_i32_0 : i32
    scf.if %2 {
      %cst_17 = arith.constant 0.000000e+00 : f32
      %31 = vector.broadcast %cst_17 : f32 to vector<8x128xf32>
      %c0_18 = arith.constant 0 : index
      %c0_19 = arith.constant 0 : index
      %32 = vector.load %arg8[%c0_18, %c0_19] : memref<8x128xf32, #tpu.memory_space<vmem>>, vector<8x128xf32>
      tpu.vector_store %arg8[%c0_18, %c0_19], %31 {strides = array<i32>} : memref<8x128xf32, #tpu.memory_space<vmem>>, vector<8x128xf32>,
    } else {
    }
    %c0 = arith.constant 0 : index
    %c0_1 = arith.constant 0 : index
    %c0_2 = arith.constant 0 : index
    %3 = vector.load %arg2[%c0, %c0_1, %c0_2] : memref<1x16x128xbf16, #tpu.memory_space<vmem>>, vector<1x16x128xbf16>
    %4 = vector.shape_cast %3 : vector<1x16x128xbf16> to vector<16x128xbf16>
    %c0_3 = arith.constant 0 : index
    %c0_4 = arith.constant 0 : index
    %5 = vector.load %arg3[%c0_3, %c0_4] : memref<128x128xbf16, #tpu.memory_space<vmem>>, vector<128x128xbf16>
    %cst = arith.constant dense<0.000000e+00> : vector<16x128xf32>
    %6 = tpu.matmul %4, %5, %cst {dimension_numbers = #tpu.dot_dimension_numbers<[1], [0], [0], [1], [0, 0, 1, 1], [], []>} : vector<16x128xbf16>, vector<128x128xbf16>, vector<16x128xf32> -> vector<16x128xf32>
    %c0_5 = arith.constant 0 : index
    %c0_6 = arith.constant 0 : index
    %7 = vector.load %arg4[%c0_5, %c0_6] : memref<1x128xf32, #tpu.memory_space<vmem>>, vector<1x128xf32>
    %8 = vector.broadcast %7 : vector<1x128xf32> to vector<16x128xf32>
    %9 = arith.addf %6, %8 : vector<16x128xf32>
    %10 = arith.mulf %9, %9 : vector<16x128xf32>
    %11 = arith.mulf %9, %10 : vector<16x128xf32>
    %cst_7 = arith.constant 4.471500e-02 : f32
    %12 = vector.broadcast %cst_7 : f32 to vector<16x128xf32>
    %13 = arith.mulf %12, %11 : vector<16x128xf32>
    %14 = arith.addf %9, %13 : vector<16x128xf32>
    %cst_8 = arith.constant 0.797884583 : f32
    %15 = vector.broadcast %cst_8 : f32 to vector<16x128xf32>
    %16 = arith.mulf %15, %14 : vector<16x128xf32>
    %17 = math.tanh %16 : vector<16x128xf32>
    %cst_9 = arith.constant 1.000000e+00 : f32
    %18 = vector.broadcast %cst_9 : f32 to vector<16x128xf32>
    %19 = arith.addf %18, %17 : vector<16x128xf32>
    %cst_10 = arith.constant 5.000000e-01 : f32
    %20 = vector.broadcast %cst_10 : f32 to vector<16x128xf32>
    %21 = arith.mulf %20, %19 : vector<16x128xf32>
    %22 = arith.mulf %9, %21 : vector<16x128xf32>
    %c0_11 = arith.constant 0 : index
    %c0_12 = arith.constant 0 : index
    %23 = vector.load %arg8[%c0_11, %c0_12] : memref<8x128xf32, #tpu.memory_space<vmem>>, vector<8x128xf32>
    %24 = vector.shape_cast %22 : vector<16x128xf32> to vector<2x8x128xf32>
    %cst_13 = arith.constant dense<0.000000e+00> : vector<8x128xf32>
    %25 = vector.multi_reduction <add>, %24, %cst_13 [0] : vector<2x8x128xf32> to vector<8x128xf32>
    %26 = arith.addf %23, %25 : vector<8x128xf32>
    %c0_14 = arith.constant 0 : index
    %c0_15 = arith.constant 0 : index
    %27 = vector.load %arg8[%c0_14, %c0_15] : memref<8x128xf32, #tpu.memory_space<vmem>>, vector<8x128xf32>
    tpu.vector_store %arg8[%c0_14, %c0_15], %26 {strides = array<i32>} : memref<8x128xf32, #tpu.memory_space<vmem>>, vector<8x128xf32>,
    %c3_i32 = arith.constant 3 : i32
    %28 = arith.cmpi eq, %arg1, %c3_i32 : i32
    %29 = arith.extui %28 : i1 to i32
    %c0_i32_16 = arith.constant 0 : i32
    %30 = arith.cmpi ne, %29, %c0_i32_16 : i32
    scf.if %30 {
      %c0_17 = arith.constant 0 : index
      %c0_18 = arith.constant 0 : index
      %31 = vector.load %arg8[%c0_17, %c0_18] : memref<8x128xf32, #tpu.memory_space<vmem>>, vector<8x128xf32>
      %cst_19 = arith.constant dense<0.000000e+00> : vector<128xf32>
      %32 = vector.multi_reduction <add>, %31, %cst_19 [0] : vector<8x128xf32> to vector<128xf32>
      %33 = vector.shape_cast %32 : vector<128xf32> to vector<1x128xf32>
      %cst_20 = arith.constant 1.562500e-02 : f32
      %34 = vector.broadcast %cst_20 : f32 to vector<1x128xf32>
      %35 = arith.mulf %33, %34 : vector<1x128xf32>
      %c0_21 = arith.constant 0 : index
      %c0_22 = arith.constant 0 : index
      %36 = vector.load %arg5[%c0_21, %c0_22] : memref<128x1xf32, #tpu.memory_space<vmem>>, vector<128x1xf32>
      %cst_23 = arith.constant dense<0.000000e+00> : vector<1x1xf32>
      %37 = tpu.matmul %35, %36, %cst_23 {dimension_numbers = #tpu.dot_dimension_numbers<[1], [0], [0], [1], [0, 0, 1, 1], [], []>} : vector<1x128xf32>, vector<128x1xf32>, vector<1x1xf32> -> vector<1x1xf32>
      %c0_24 = arith.constant 0 : index
      %c0_25 = arith.constant 0 : index
      %38 = vector.load %arg6[%c0_24, %c0_25] : memref<1x1xf32, #tpu.memory_space<vmem>>, vector<1x1xf32>
      %39 = arith.addf %37, %38 : vector<1x1xf32>
      %c0_26 = arith.constant 0 : index
      %c0_27 = arith.constant 0 : index
      %c0_28 = arith.constant 0 : index
      %40 = vector.load %arg7[%c0_26, %c0_27, %c0_28] : memref<1x1x1xf32, #tpu.memory_space<vmem>>, vector<1x1x1xf32>
      %41 = vector.shape_cast %40 : vector<1x1x1xf32> to vector<1x1xf32>
      %42 = vector.shape_cast %39 : vector<1x1xf32> to vector<1x1x1xf32>
      tpu.vector_store %arg7[%c0_26, %c0_27, %c0_28], %42 {strides = array<i32>} : memref<1x1x1xf32, #tpu.memory_space<vmem>>, vector<1x1x1xf32>,
    } else {
    }
    return
  }
  func.func @transform_0(%arg0: i32, %arg1: i32) -> (i32, i32, i32) {
    %c0_i32 = arith.constant 0 : i32
    %c0_i32_0 = arith.constant 0 : i32
    return %arg0, %arg1, %c0_i32 : i32, i32, i32
  }
  func.func @transform_1(%arg0: i32, %arg1: i32) -> (i32, i32) {
    %c0_i32 = arith.constant 0 : i32
    %c0_i32_0 = arith.constant 0 : i32
    %c0_i32_1 = arith.constant 0 : i32
    return %c0_i32, %c0_i32_0 : i32, i32
  }
  func.func @transform_2(%arg0: i32, %arg1: i32) -> (i32, i32) {
    %c0_i32 = arith.constant 0 : i32
    %c0_i32_0 = arith.constant 0 : i32
    %c0_i32_1 = arith.constant 0 : i32
    return %c0_i32, %c0_i32_0 : i32, i32
  }
  func.func @transform_3(%arg0: i32, %arg1: i32) -> (i32, i32) {
    %c0_i32 = arith.constant 0 : i32
    %c0_i32_0 = arith.constant 0 : i32
    %c0_i32_1 = arith.constant 0 : i32
    return %c0_i32, %c0_i32_0 : i32, i32
  }
  func.func @transform_4(%arg0: i32, %arg1: i32) -> (i32, i32) {
    %c0_i32 = arith.constant 0 : i32
    %c0_i32_0 = arith.constant 0 : i32
    %c0_i32_1 = arith.constant 0 : i32
    return %c0_i32, %c0_i32_0 : i32, i32
  }
  func.func @transform_5(%arg0: i32, %arg1: i32) -> (i32, i32, i32) {
    %c0_i32 = arith.constant 0 : i32
    %c0_i32_0 = arith.constant 0 : i32
    %c0_i32_1 = arith.constant 0 : i32
    return %arg0, %c0_i32, %c0_i32_0 : i32, i32, i32
  }
}

</mosaic_0001>

<llo_original>
// kernel: _lambda_.1
$region0: #{_lambda_.1}
  #allocation0 [shape = 'u32[]', space=smem, size = 0x4, offset = 0x4, fixed_abs, tag = 'smem constant byte address 0x4 - core index']
  #allocation1 [shape = 'u32[144,128]{1,0:T(1,128)}', space=vmem, size = 0x12000, scoped, tag = 'internal scratch']
  #allocation2 [shape = 'f32[8,128]{1,0:T(8,128)}', space=vmem, size = 0x1000, scoped, tag = 'scratch operand']
  #allocation3 [shape = 'f32[1,1]{1,0:T(1,128)S(1)}', space=vmem, size = 0x200, scoped, tag = 'scoped memory for _lambda_.1']
  %s0 = inlined_call_operand.vmem [shape: bf16[2,64,128], index: 0, kind: input, shape index: {}]
  %s1 = inlined_call_operand.vmem [shape: bf16[128,128], index: 1, kind: input, shape index: {}]
  %s2 = inlined_call_operand.vmem [shape: f32[1,128], index: 2, kind: input, shape index: {}]
  %s3 = inlined_call_operand.vmem [shape: f32[128,1], index: 3, kind: input, shape index: {}]
  %s4 = inlined_call_operand.<no memory space> [shape: f32[1,1], index: 4, kind: input, shape index: {}]
  %s5 = inlined_call_operand.vmem [shape: f32[2,1,1], index: 5, kind: output, shape index: {}]
  %s6 = sld [smem:[#allocation0]]
  $region61: #{_lambda_.1} parent=0
    _
  %s8 = ssub.s32 1, %s6
  %s9 = scalar_select 0, %s8, %s6
  %v10 = vstv %s4
  %11 = vst [vmem:[#allocation3] sm:$0x1] %v10
  loop: start=0, step=1, limit=10
  $region2: #{_lambda_.1} parent=0 // loop_pre_header
    _
  $region3: #{_lambda_.1} parent=0 // loop_header
    %s13 = sphi 0, %s17
    %p14 = scmp.ge.s32.totalorder %s13, 10
    %s20 = sphi 0, %s32
    %s21 = sphi 0, %s28
    %s22 = sphi 0, %s20
    %s23 = sphi 0, %s21
    %s24 = sphi 0, %s22
    %s25 = sphi 0, %s23
    %s37 = sphi 0, %s39
    %s40 = sphi 0, %s37
    %s41 = sphi 0, %s40
    %s57 = sphi 0, %s41
    %s61 = sphi 0, %s61
    %s63 = sphi 0, %s61
    %s64 = sphi 0, %s63
    %s78 = sphi 0, %s64
    %s82 = sphi 0, %s82
    %s84 = sphi 0, %s82
    %s85 = sphi 0, %s84
    %s99 = sphi 0, %s85
    %s103 = sphi 0, %s103
    %s105 = sphi 0, %s103
    %s106 = sphi 0, %s105
    %s120 = sphi 0, %s106
    %s124 = sphi 0, %s124
    %s126 = sphi 0, %s124
    %s127 = sphi 0, %s126
    %s141 = sphi 0, %s127
    %s147 = sphi 0, %s149
    %s150 = sphi 0, %s147
    %s151 = sphi 0, %s150
    %s167 = sphi 0, %s151
  $region4: #{_lambda_.1} parent=0 // loop_header_branch
    %16 = sbr.rel (%p14) target = $region8
  $region5: #{_lambda_.1} parent=0 // loop_body
    %s18 = ssub.s32 %s13, 1
    %s19 = ssub.s32 %s13, 2
    %s26 = sadd.s32 1, %s21
    %p27 = scmp.ge.s32.totalorder %s26, 4
    %s28 = scalar_select %p27, 0, %s26
    %s29 = sadd.s32 1, %s20
    %s30 = scalar_select %p27, %s29, %s20
    %p31 = scmp.ge.s32.totalorder %s30, 2
    %s32 = scalar_select %p31, 0, %s30
    %s33 = ssub.s32 %s20, %s32
    %s34 = ssub.s32 %s21, %s28
    %s35 = sor.u32 %s33, %s34
    %p36 = scmp.eq.s32.totalorder %s35, 0
    %s38 = sadd.s32 %s37, 1
    %s39 = scalar_select %p36, %s37, %s38
    %p42 = pneg %p36
    %p43 = scmp.eq.s32.totalorder %s13, 7
    %p44 = por %p42, %p43
    %p45 = scmp.ne.s32.totalorder %s37, %s40
    %p46 = scmp.eq.s32.totalorder %s13, 0
    %p47 = por %p45, %p46
    %p48 = scmp.ne.s32.totalorder %s37, %s40
    %p49 = scmp.eq.s32.totalorder %s18, 7
    %p50 = por %p48, %p49
    %p51 = scmp.ne.s32.totalorder %s40, %s41
    %p52 = scmp.eq.s32.totalorder %s18, 0
    %p53 = por %p51, %p52
    %p54 = scmp.ne.s32.totalorder %s40, %s41
    %p55 = scmp.eq.s32.totalorder %s19, 7
    %p56 = por %p54, %p55
    %p58 = scmp.ne.s32.totalorder %s41, %s57
    %p59 = scmp.eq.s32.totalorder %s19, 0
    %p60 = por %p58, %p59
    %s62 = sadd.s32 %s61, 1
    %p65 = scmp.eq.s32.totalorder %s13, 7
    %p66 = scmp.ne.s32.totalorder %s61, %s63
    %p67 = scmp.eq.s32.totalorder %s13, 0
    %p68 = por %p66, %p67
    %p69 = scmp.ne.s32.totalorder %s61, %s63
    %p70 = scmp.eq.s32.totalorder %s18, 7
    %p71 = por %p69, %p70
    %p72 = scmp.ne.s32.totalorder %s63, %s64
    %p73 = scmp.eq.s32.totalorder %s18, 0
    %p74 = por %p72, %p73
    %p75 = scmp.ne.s32.totalorder %s63, %s64
    %p76 = scmp.eq.s32.totalorder %s19, 7
    %p77 = por %p75, %p76
    %p79 = scmp.ne.s32.totalorder %s64, %s78
    %p80 = scmp.eq.s32.totalorder %s19, 0
    %p81 = por %p79, %p80
    %s83 = sadd.s32 %s82, 1
    %p86 = scmp.eq.s32.totalorder %s13, 7
    %p87 = scmp.ne.s32.totalorder %s82, %s84
    %p88 = scmp.eq.s32.totalorder %s13, 0
    %p89 = por %p87, %p88
    %p90 = scmp.ne.s32.totalorder %s82, %s84
    %p91 = scmp.eq.s32.totalorder %s18, 7
    %p92 = por %p90, %p91
    %p93 = scmp.ne.s32.totalorder %s84, %s85
    %p94 = scmp.eq.s32.totalorder %s18, 0
    %p95 = por %p93, %p94
    %p96 = scmp.ne.s32.totalorder %s84, %s85
    %p97 = scmp.eq.s32.totalorder %s19, 7
    %p98 = por %p96, %p97
    %p100 = scmp.ne.s32.totalorder %s85, %s99
    %p101 = scmp.eq.s32.totalorder %s19, 0
    %p102 = por %p100, %p101
    %s104 = sadd.s32 %s103, 1
    %p107 = scmp.eq.s32.totalorder %s13, 7
    %p108 = scmp.ne.s32.totalorder %s103, %s105
    %p109 = scmp.eq.s32.totalorder %s13, 0
    %p110 = por %p108, %p109
    %p111 = scmp.ne.s32.totalorder %s103, %s105
    %p112 = scmp.eq.s32.totalorder %s18, 7
    %p113 = por %p111, %p112
    %p114 = scmp.ne.s32.totalorder %s105, %s106
    %p115 = scmp.eq.s32.totalorder %s18, 0
    %p116 = por %p114, %p115
    %p117 = scmp.ne.s32.totalorder %s105, %s106
    %p118 = scmp.eq.s32.totalorder %s19, 7
    %p119 = por %p117, %p118
    %p121 = scmp.ne.s32.totalorder %s106, %s120
    %p122 = scmp.eq.s32.totalorder %s19, 0
    %p123 = por %p121, %p122
    %s125 = sadd.s32 %s124, 1
    %p128 = scmp.eq.s32.totalorder %s13, 7
    %p129 = scmp.ne.s32.totalorder %s124, %s126
    %p130 = scmp.eq.s32.totalorder %s13, 0
    %p131 = por %p129, %p130
    %p132 = scmp.ne.s32.totalorder %s124, %s126
    %p133 = scmp.eq.s32.totalorder %s18, 7
    %p134 = por %p132, %p133
    %p135 = scmp.ne.s32.totalorder %s126, %s127
    %p136 = scmp.eq.s32.totalorder %s18, 0
    %p137 = por %p135, %p136
    %p138 = scmp.ne.s32.totalorder %s126, %s127
    %p139 = scmp.eq.s32.totalorder %s19, 7
    %p140 = por %p138, %p139
    %p142 = scmp.ne.s32.totalorder %s127, %s141
    %p143 = scmp.eq.s32.totalorder %s19, 0
    %p144 = por %p142, %p143
    %s145 = ssub.s32 %s20, %s32
    %p146 = scmp.eq.s32.totalorder %s145, 0
    %s148 = sadd.s32 %s147, 1
    %s149 = scalar_select %p146, %s147, %s148
    %p152 = pneg %p146
    %p153 = scmp.eq.s32.totalorder %s13, 7
    %p154 = por %p152, %p153
    %p155 = scmp.ne.s32.totalorder %s147, %s150
    %p156 = scmp.eq.s32.totalorder %s13, 0
    %p157 = por %p155, %p156
    %p158 = scmp.ne.s32.totalorder %s147, %s150
    %p159 = scmp.eq.s32.totalorder %s18, 7
    %p160 = por %p158, %p159
    %p161 = scmp.ne.s32.totalorder %s150, %s151
    %p162 = scmp.eq.s32.totalorder %s18, 0
    %p163 = por %p161, %p162
    %p164 = scmp.ne.s32.totalorder %s150, %s151
    %p165 = scmp.eq.s32.totalorder %s19, 7
    %p166 = por %p164, %p165
    %p168 = scmp.ne.s32.totalorder %s151, %s167
    %p169 = scmp.eq.s32.totalorder %s19, 0
    %p170 = por %p168, %p169
    %p171 = scmp.le.s32.totalorder 1, %s13
    %p172 = scmp.lt.s32.totalorder %s13, 9
    %p173 = pnand %p171, %p172
    %p174 = pneg %p173
    // Predicated region
    $region9: #{_lambda_.1} parent=5 // pred_check
      _
    $region10: #{_lambda_.1} parent=5 // pred_check_branch
      %176 = sbr.rel (%p173) target = $region12
    $region11: #{_lambda_.1} parent=5 // pred_region
      %s177 = ssub.s32 %s13, 1
      // Predicated region
      $region13: #{_lambda_.1} parent=11 // pred_check
        %p178 = pneg %p74
      $region14: #{_lambda_.1} parent=11 // pred_check_branch
        %180 = sbr.rel (%p178) target = $region16
      $region15: #{_lambda_.1} parent=11 // pred_region
        _
      $region16: #{_lambda_.1} parent=11 // pred_fallthru
        _
      // Predicated region
      $region17: #{_lambda_.1} parent=11 // pred_check
        %p181 = pneg %p95
      $region18: #{_lambda_.1} parent=11 // pred_check_branch
        %183 = sbr.rel (%p181) target = $region20
      $region19: #{_lambda_.1} parent=11 // pred_region
        _
      $region20: #{_lambda_.1} parent=11 // pred_fallthru
        _
      // Predicated region
      $region21: #{_lambda_.1} parent=11 // pred_check
        %p184 = pneg %p116
      $region22: #{_lambda_.1} parent=11 // pred_check_branch
        %186 = sbr.rel (%p184) target = $region24
      $region23: #{_lambda_.1} parent=11 // pred_region
        _
      $region24: #{_lambda_.1} parent=11 // pred_fallthru
        _
      // Predicated region
      $region25: #{_lambda_.1} parent=11 // pred_check
        %p187 = pneg %p137
      $region26: #{_lambda_.1} parent=11 // pred_check_branch
        %189 = sbr.rel (%p187) target = $region28
      $region27: #{_lambda_.1} parent=11 // pred_region
        _
      $region28: #{_lambda_.1} parent=11 // pred_fallthru
        _
    $region12: #{_lambda_.1} parent=5 // pred_fallthru
      _
    %p190 = scmp.lt.s32.totalorder %s13, 8
    // Predicated region
    $region29: #{_lambda_.1} parent=5 // pred_check
      %p191 = pneg %p190
    $region30: #{_lambda_.1} parent=5 // pred_check_branch
      %193 = sbr.rel (%p191) target = $region32
    $region31: #{_lambda_.1} parent=5 // pred_region
      // Predicated region
      $region33: #{_lambda_.1} parent=31 // pred_check
        %p194 = pneg %p47
      $region34: #{_lambda_.1} parent=31 // pred_check_branch
        %196 = sbr.rel (%p194) target = $region36
      $region35: #{_lambda_.1} parent=31 // pred_region
        %s197 = smul.u32 2, %s21
        %p198 = scmp.lt.s32.totalorder %s20, 1
        %s199 = scalar_select %p198, %s20, 1
        %p200 = scmp.lt.s32.totalorder %s197, 7
        %s201 = scalar_select %p200, %s197, 7
        %s202 = smul.addr %s199, 8
        %s203 = sadd.s32 %s201, %s202
        %s204 = smul.addr %s203, 4
        %s205 = scalar_lea.vmem %s0, %s204
        %s206 = smul.u32 2, %s21
      $region36: #{_lambda_.1} parent=31 // pred_fallthru
        _
    $region32: #{_lambda_.1} parent=5 // pred_fallthru
      _
    %p207 = scmp.le.s32.totalorder 1, %s13
    %p208 = scmp.lt.s32.totalorder %s13, 9
    %p209 = pnand %p207, %p208
    %p210 = pneg %p209
    // Predicated region
    $region37: #{_lambda_.1} parent=5 // pred_check
      _
    $region38: #{_lambda_.1} parent=5 // pred_check_branch
      %212 = sbr.rel (%p209) target = $region40
    $region39: #{_lambda_.1} parent=5 // pred_region
      %s213 = ssub.s32 %s13, 1
      %s214 = smul.u32 2, %s23
      %p215 = scmp.lt.s32.totalorder %s22, 1
      %s216 = scalar_select %p215, %s22, 1
      %p217 = scmp.lt.s32.totalorder %s214, 7
      %s218 = scalar_select %p217, %s214, 7
      %s219 = smul.addr %s216, 8
      %s220 = sadd.s32 %s218, %s219
      %s221 = smul.addr %s220, 4
      %s222 = scalar_lea.vmem %s0, %s221
      %p223 = pneg %p53
      %p224 = pneg %p50
      %p225 = pneg %p74
      %p226 = pneg %p71
      %p227 = pneg %p95
      %p228 = pneg %p92
      %p229 = pneg %p116
      %p230 = pneg %p113
      %p231 = pneg %p137
      %p232 = pneg %p134
      %p233 = pneg %p163
      %p234 = pneg %p160
      %p235 = scmp.lt.s32.totalorder %s22, 1
      %s236 = scalar_select %p235, %s22, 1
      %s237 = scalar_lea.vmem %s5, %s236
      %s238 = smul.u32 2, %s23
      %p239 = scmp.lt.s32.totalorder %s22, 1
      %s240 = scalar_select %p239, %s22, 1
      %p241 = scmp.lt.s32.totalorder %s238, 7
      %s242 = scalar_select %p241, %s238, 7
      %s243 = smul.addr %s240, 8
      %s244 = sadd.s32 %s242, %s243
      %s245 = smul.addr %s244, 4
      %s246 = scalar_lea.vmem %s0, %s245
      %s247 = smul.u32 2, %s23
      %p248 = scmp.lt.s32.totalorder %s22, 1
      %s249 = scalar_select %p248, %s22, 1
      %s250 = scalar_lea.vmem %s5, %s249
      %p252 = scmp.eq.s32.totalorder %s23, 0
      // Predicated region
      $region41: #{_lambda_.1} parent=39 // pred_check
        %p253 = pneg %p252
      $region42: #{_lambda_.1} parent=39 // pred_check_branch
        %255 = sbr.rel (%p253) target = $region44
      $region43: #{_lambda_.1} parent=39 // pred_region
        %256 = vst [vmem:[#allocation2] sm:$0xff] 0.0
      $region44: #{_lambda_.1} parent=39 // pred_fallthru
        _
      %v257 = vld [vmem:[%s246] sm:$0xf]
      %v258 = vld [vmem:[%s246 + $0x4] sm:$0xf]
      %v259 = vld [vmem:[%s1] sm:$0xf]
      %v260 = vld [vmem:[%s1 + $0x4] sm:$0xf]
      %v261 = vld [vmem:[%s1 + $0x8] sm:$0xf]
      %v262 = vld [vmem:[%s1 + $0xc] sm:$0xf]
      %v263 = vld [vmem:[%s1 + $0x10] sm:$0xf]
      %v264 = vld [vmem:[%s1 + $0x14] sm:$0xf]
      %v265 = vld [vmem:[%s1 + $0x18] sm:$0xf]
      %v266 = vld [vmem:[%s1 + $0x1c] sm:$0xf]
      %v267 = vld [vmem:[%s1 + $0x20] sm:$0xf]
      %v268 = vld [vmem:[%s1 + $0x24] sm:$0xf]
      %v269 = vld [vmem:[%s1 + $0x28] sm:$0xf]
      %v270 = vld [vmem:[%s1 + $0x2c] sm:$0xf]
      %v271 = vld [vmem:[%s1 + $0x30] sm:$0xf]
      %v272 = vld [vmem:[%s1 + $0x34] sm:$0xf]
      %v273 = vld [vmem:[%s1 + $0x38] sm:$0xf]
      %v274 = vld [vmem:[%s1 + $0x3c] sm:$0xf]
      %v275 = vld [vmem:[%s2] sm:$0x1]
      %v277 = vlaneseq
      %v278 = vshrl.u32 %v277, 7
      %v279 = vsub.s32 0, %v278
      %v280 = vrot.slane %v275, %v279
      %v284 = vunpack.c.l.b16 %v257
      %v285 = vunpack.c.l.b16 %v258
      %v286 = vpack.c.b16 %v285, %v284
      %v304 = vunpack.c.l.b16 %v259
      %v305 = vunpack.c.l.b16 %v260
      %v306 = vunpack.c.l.b16 %v261
      %v307 = vunpack.c.l.b16 %v262
      %v308 = vunpack.c.l.b16 %v263
      %v309 = vunpack.c.l.b16 %v264
      %v310 = vunpack.c.l.b16 %v265
      %v311 = vunpack.c.l.b16 %v266
      %v312 = vunpack.c.l.b16 %v267
      %v313 = vunpack.c.l.b16 %v268
      %v314 = vunpack.c.l.b16 %v269
      %v315 = vunpack.c.l.b16 %v270
      %v316 = vunpack.c.l.b16 %v271
      %v317 = vunpack.c.l.b16 %v272
      %v318 = vunpack.c.l.b16 %v273
      %v319 = vunpack.c.l.b16 %v274
      %v320 = vpack.c.b16 %v305, %v304
      %v321 = vpack.c.b16 %v307, %v306
      %v322 = vpack.c.b16 %v309, %v308
      %v323 = vpack.c.b16 %v311, %v310
      %v324 = vpack.c.b16 %v313, %v312
      %v325 = vpack.c.b16 %v315, %v314
      %v326 = vpack.c.b16 %v317, %v316
      %v327 = vpack.c.b16 %v319, %v318
      %336 = vmatprep.subr.bf16.mxu0 0
      %337 = vmatpush1.bf16.msra.mxu0 %v320
      %338 = vmatprep.subr.bf16.mxu0 0
      %339 = vmatpush1.bf16.msra.mxu0 %v321
      %340 = vmatprep.subr.bf16.mxu0 0
      %341 = vmatpush1.bf16.msra.mxu0 %v322
      %342 = vmatprep.subr.bf16.mxu0 0
      %343 = vmatpush1.bf16.msra.mxu0 %v323
      %344 = vmatprep.subr.bf16.mxu0 0
      %345 = vmatpush1.bf16.msra.mxu0 %v324
      %346 = vmatprep.subr.bf16.mxu0 0
      %347 = vmatpush1.bf16.msra.mxu0 %v325
      %348 = vmatprep.subr.bf16.mxu0 0
      %349 = vmatpush1.bf16.msra.mxu0 %v326
      %350 = vmatprep.subr.bf16.mxu0 0
      %351 = vmatpush1.bf16.msra.mxu0 %v327
      %352 = vmatprep.subr.bf16.mxu0 0
      %353 = vmatpush1.bf16.msra.mxu0 0
      %354 = vmatprep.subr.bf16.mxu0 0
      %355 = vmatpush1.bf16.msra.mxu0 0
      %356 = vmatprep.subr.bf16.mxu0 0
      %357 = vmatpush1.bf16.msra.mxu0 0
      %358 = vmatprep.subr.bf16.mxu0 0
      %359 = vmatpush1.bf16.msra.mxu0 0
      %360 = vmatprep.subr.bf16.mxu0 0
      %361 = vmatpush1.bf16.msra.mxu0 0
      %362 = vmatprep.subr.bf16.mxu0 0
      %363 = vmatpush1.bf16.msra.mxu0 0
      %364 = vmatprep.subr.bf16.mxu0 0
      %365 = vmatpush1.bf16.msra.mxu0 0
      %366 = vmatprep.subr.bf16.mxu0 0
      %367 = vmatpush1.bf16.msra.mxu0 0
      %368 = vmatprep.mubr.bf16.mxu0 0
      %369 = vmatmul.mubr.bf16.gmra.mrb[0].mxu0 %v286
      %v370 = vpop.f32.mrb[0].mxu0
      %v371 = vadd.f32 %v280, %v370
      %v372 = vpop.f32.mrb[0].mxu0
      %v373 = vpop.f32.mrb[0].mxu0
      %v374 = vadd.f32 %v280, %v373
      %v375 = vpop.f32.mrb[0].mxu0
      %376 = vdwg.mxu0
      %v377 = vmul.f32 %v371, %v371
      %v378 = vmul.f32 %v374, %v374
      %v379 = vmul.f32 %v371, %v377
      %v380 = vmul.f32 %v374, %v378
      %v381 = vmul.f32 %v379, 0.044715
      %v382 = vmul.f32 %v380, 0.044715
      %v383 = vadd.f32 %v371, %v381
      %v384 = vadd.f32 %v374, %v382
      %v385 = vmul.f32 %v383, 0.7978846
      %v386 = vmul.f32 %v384, 0.7978846
      %v387 = vtanh.pop %v385
      %v388 = vtanh.pop %v386
      %v389 = vadd.f32 %v387, 1.0
      %v390 = vadd.f32 %v388, 1.0
      %v391 = vmul.f32 %v389, 0.5
      %v392 = vmul.f32 %v390, 0.5
      %v393 = vmul.f32 %v371, %v391
      %v394 = vmul.f32 %v374, %v392
      %v395 = vld [vmem:[#allocation2] sm:$0xff]
      %v396 = vadd.f32 %v393, %v394
      %v397 = vadd.f32 %v395, %v396
      %398 = vst [vmem:[#allocation2] sm:$0xff] %v397
      %p399 = scmp.eq.s32.totalorder %s23, 3
      // Predicated region
      $region45: #{_lambda_.1} parent=39 // pred_check
        %p400 = pneg %p399
      $region46: #{_lambda_.1} parent=39 // pred_check_branch
        %402 = sbr.rel (%p400) target = $region48
      $region47: #{_lambda_.1} parent=39 // pred_region
        %v403 = vld [vmem:[#allocation2] sm:$0xff]
        %v404 = vrot.slane %v403, 4
        %v405 = vadd.f32 %v403, %v404
        %v406 = vrot.slane %v405, 2
        %v407 = vadd.f32 %v405, %v406
        %v408 = vrot.slane %v407, 1
        %v409 = vadd.f32 %v407, %v408
        %v410 = vmul.f32 %v409, 0.015625
        %v411 = vld [vmem:[%s3] sm:$0xff]
        %v412 = vld [vmem:[%s3 + $0x8] sm:$0xff]
        %v413 = vld [vmem:[%s3 + $0x10] sm:$0xff]
        %v414 = vld [vmem:[%s3 + $0x18] sm:$0xff]
        %v415 = vld [vmem:[%s3 + $0x20] sm:$0xff]
        %v416 = vld [vmem:[%s3 + $0x28] sm:$0xff]
        %v417 = vld [vmem:[%s3 + $0x30] sm:$0xff]
        %v418 = vld [vmem:[%s3 + $0x38] sm:$0xff]
        %v419 = vld [vmem:[%s3 + $0x40] sm:$0xff]
        %v420 = vld [vmem:[%s3 + $0x48] sm:$0xff]
        %v421 = vld [vmem:[%s3 + $0x50] sm:$0xff]
        %v422 = vld [vmem:[%s3 + $0x58] sm:$0xff]
        %v423 = vld [vmem:[%s3 + $0x60] sm:$0xff]
        %v424 = vld [vmem:[%s3 + $0x68] sm:$0xff]
        %v425 = vld [vmem:[%s3 + $0x70] sm:$0xff]
        %v426 = vld [vmem:[%s3 + $0x78] sm:$0xff]
        %v427 = vld [vmem:[#allocation3] sm:$0x1]
        %428 = vmatprep.subr.mxu0 0.0
        %429 = vmatpush1.msra.mxu0 %v411
        %430 = vmatprep.subr.mxu0 0.0
        %431 = vmatpush1.msra.mxu0 %v412
        %432 = vmatprep.subr.mxu0 0.0
        %433 = vmatpush1.msra.mxu0 %v413
        %434 = vmatprep.subr.mxu0 0.0
        %435 = vmatpush1.msra.mxu0 %v414
        %436 = vmatprep.subr.mxu0 0.0
        %437 = vmatpush1.msra.mxu0 %v415
        %438 = vmatprep.subr.mxu0 0.0
        %439 = vmatpush1.msra.mxu0 %v416
        %440 = vmatprep.subr.mxu0 0.0
        %441 = vmatpush1.msra.mxu0 %v417
        %442 = vmatprep.subr.mxu0 0.0
        %443 = vmatpush1.msra.mxu0 %v418
        %444 = vmatprep.subr.mxu0 0.0
        %445 = vmatpush1.msra.mxu0 %v419
        %446 = vmatprep.subr.mxu0 0.0
        %447 = vmatpush1.msra.mxu0 %v420
        %448 = vmatprep.subr.mxu0 0.0
        %449 = vmatpush1.msra.mxu0 %v421
        %450 = vmatprep.subr.mxu0 0.0
        %451 = vmatpush1.msra.mxu0 %v422
        %452 = vmatprep.subr.mxu0 0.0
        %453 = vmatpush1.msra.mxu0 %v423
        %454 = vmatprep.subr.mxu0 0.0
        %455 = vmatpush1.msra.mxu0 %v424
        %456 = vmatprep.subr.mxu0 0.0
        %457 = vmatpush1.msra.mxu0 %v425
        %458 = vmatprep.subr.mxu0 0.0
        %459 = vmatpush1.msra.mxu0 %v426
        %460 = vmatprep.subr.mxu0 0.0
        %461 = vmatpush1.msra.mxu0 0.0
        %462 = vmatprep.subr.mxu0 0.0
        %463 = vmatpush1.msra.mxu0 0.0
        %464 = vmatprep.subr.mxu0 0.0
        %465 = vmatpush1.msra.mxu0 0.0
        %466 = vmatprep.subr.mxu0 0.0
        %467 = vmatpush1.msra.mxu0 0.0
        %468 = vmatprep.subr.mxu0 0.0
        %469 = vmatpush1.msra.mxu0 0.0
        %470 = vmatprep.subr.mxu0 0.0
        %471 = vmatpush1.msra.mxu0 0.0
        %472 = vmatprep.subr.mxu0 0.0
        %473 = vmatpush1.msra.mxu0 0.0
        %474 = vmatprep.subr.mxu0 0.0
        %475 = vmatpush1.msra.mxu0 0.0
        %476 = vmatprep.subr.mxu0 0.0
        %477 = vmatpush1.msra.mxu0 0.0
        %478 = vmatprep.subr.mxu0 0.0
        %479 = vmatpush1.msra.mxu0 0.0
        %480 = vmatprep.subr.mxu0 0.0
        %481 = vmatpush1.msra.mxu0 0.0
        %482 = vmatprep.subr.mxu0 0.0
        %483 = vmatpush1.msra.mxu0 0.0
        %484 = vmatprep.subr.mxu0 0.0
        %485 = vmatpush1.msra.mxu0 0.0
        %486 = vmatprep.subr.mxu0 0.0
        %487 = vmatpush1.msra.mxu0 0.0
        %488 = vmatprep.subr.mxu0 0.0
        %489 = vmatpush1.msra.mxu0 0.0
        %490 = vmatprep.subr.mxu0 0.0
        %491 = vmatpush1.msra.mxu0 0.0
        %492 = vmatprep.mubr.f32.mxu0 0.0
        %493 = vmatmul.mubr.f32.gmra.mrb[0].mxu0 %v410
        %v494 = vpop.f32.mrb[0].mxu0
        %v495 = vadd.f32 %v427, %v494
        %v496 = vpop.f32.mrb[0].mxu0
        %497 = vdwg.mxu0
        %vm498 = vcmask 0
        %499 = vst.msk [vmem:[%s250] sm:$0x1] %vm498, %v495
      $region48: #{_lambda_.1} parent=39 // pred_fallthru
        _
      %p500 = scmp.lt.s32.totalorder %s22, 1
      %s501 = scalar_select %p500, %s22, 1
      %s502 = scalar_lea.vmem %s5, %s501
      // Predicated region
      $region49: #{_lambda_.1} parent=39 // pred_check
        %p503 = pneg %p160
      $region50: #{_lambda_.1} parent=39 // pred_check_branch
        %505 = sbr.rel (%p503) target = $region52
      $region51: #{_lambda_.1} parent=39 // pred_region
        _
      $region52: #{_lambda_.1} parent=39 // pred_fallthru
        _
    $region40: #{_lambda_.1} parent=5 // pred_fallthru
      _
    %p506 = scmp.le.s32.totalorder 2, %s13
    // Predicated region
    $region53: #{_lambda_.1} parent=5 // pred_check
      %p507 = pneg %p506
    $region54: #{_lambda_.1} parent=5 // pred_check_branch
      %509 = sbr.rel (%p507) target = $region56
    $region55: #{_lambda_.1} parent=5 // pred_region
      %s510 = ssub.s32 %s13, 2
      // Predicated region
      $region57: #{_lambda_.1} parent=55 // pred_check
        %p511 = pneg %p166
      $region58: #{_lambda_.1} parent=55 // pred_check_branch
        %513 = sbr.rel (%p511) target = $region60
      $region59: #{_lambda_.1} parent=55 // pred_region
        %p514 = scmp.lt.s32.totalorder %s24, 1
        %s515 = scalar_select %p514, %s24, 1
        %s516 = scalar_lea.vmem %s5, %s515
      $region60: #{_lambda_.1} parent=55 // pred_fallthru
        _
    $region56: #{_lambda_.1} parent=5 // pred_fallthru
      _
  $region6: #{_lambda_.1} parent=0 // loop_footer
    %s17 = sadd.s32 1, %s13
  $region7: #{_lambda_.1} parent=0 // loop_footer_branch
    %12 = sbr.rel target = $region3
  $region8: #{_lambda_.1} parent=0 // loop_exit
    _

</llo_original>
